<compile_context>
chip_gen: v7x
topology: tpu7x:2x2x1
jax: 0.10.0
libtpu: 0.0.40
codegen_flags: <defaults>
</compile_context>

<pallas_src>
import numpy as np
import jax
import jax.numpy as jnp
from jax.experimental import pallas as pl
from jax.experimental.pallas import tpu as pltpu

_LANE = 128


def _round_up(a, b):
    return (a + b - 1) // b * b


def _fused_deconv_bn_relu_kernel(w_ref, b_ref, x_ref, o_ref):
    # w_ref: (Nout, Cin)  x_ref: (Cin, tp)  b_ref: (Nout, 1) f32  o_ref: (Nout, tp)
    y = jnp.dot(w_ref[...], x_ref[...], preferred_element_type=jnp.float32)
    y = jnp.maximum(y + b_ref[...], 0.0)          # folded BN bias + ReLU (f32 in-register)
    o_ref[...] = y.astype(o_ref.dtype)            # cast only at the store


def _vmem_capacity_bytes():
    try:
        return int(pltpu.get_tpu_info().vmem_capacity_bytes)
    except Exception:
        return 64 * 1024 * 1024  # conservative (v7x per-TC size)


def conv_transpose_bn_act(x_nchw, weight, gamma, beta, running_mean, running_var,
                          *, kernel_size, stride, eps=1e-5,
                          compute_dtype=jnp.bfloat16, max_tile_pixels=2048):
    """x_nchw: (N, Cin, H, W); weight: (Cin, Cout, K, K) (PyTorch ConvTranspose2d layout).

    Returns (N, Cout, H*K, W*K) in `compute_dtype`.
    """
    assert kernel_size == stride, "kernel only implements the non-overlapping K==S case"
    N, Cin, H, W = x_nchw.shape
    Cin_w, Cout, K, _ = weight.shape
    assert Cin_w == Cin

    HW = H * W
    Nout = Cout * K * K

    # ---- glue: BN folding into the weight (one-time, constant-sized) ----
    bn_scale_c = gamma / jnp.sqrt(running_var + eps)                   # (Cout,)
    bn_bias_c = beta - running_mean * bn_scale_c                       # (Cout,)
    scale_rep = jnp.repeat(bn_scale_c, K * K)                          # (Nout,)
    bias_col = jnp.repeat(bn_bias_c, K * K).reshape(Nout, 1)           # (Nout, 1) f32
    bias_col = bias_col.astype(jnp.float32)

    w2d = weight.reshape(Cin, Nout)                                    # (Cin, Nout)
    wT = (w2d * scale_rep[None, :]).T.astype(compute_dtype)            # (Nout, Cin)

    # ---- glue: transpose-free input view + minimal (128-lane) pixel padding ----
    HW_pad = _round_up(HW, _LANE)
    n_lane_blocks = HW_pad // _LANE

    # VMEM budget: physical capacity minus headroom; footprint = double-buffered
    # (input + output) tiles + grid-invariant weight/bias (2 buffers each).
    vmem_budget = max(_vmem_capacity_bytes() - 16 * 1024 * 1024, 16 * 1024 * 1024)
    in_bpe = jnp.dtype(compute_dtype).itemsize
    out_bpe = jnp.dtype(compute_dtype).itemsize
    per_px = 2 * (Cin * in_bpe + Nout * out_bpe)           # double-buffered tile bytes / pixel
    resident = 2 * Nout * Cin * in_bpe + 2 * Nout * 4      # weight + bias
    avail = max(vmem_budget - resident, per_px * _LANE)
    tp_cap = min(int(max_tile_pixels), int(avail // per_px))

    # Tile = largest multiple of 128 that divides HW_pad and fits the cap
    # (so tiling never adds padding beyond the 128-lane alignment).
    max_blocks = max(min(tp_cap // _LANE, n_lane_blocks), 1)
    if N == 1 and n_lane_blocks >= 2:
        # keep >= 2 pixel tiles so both v7x TensorCores get work when batch == 1
        max_blocks = max(min(max_blocks, n_lane_blocks // 2), 1)
    g = 1
    for d in range(1, max_blocks + 1):
        if n_lane_blocks % d == 0:
            g = d
    tp = g * _LANE

    x3d = x_nchw.reshape(N, Cin, HW).astype(compute_dtype)
    if HW_pad != HW:
        x3d = jnp.pad(x3d, ((0, 0), (0, 0), (0, HW_pad - HW)))

    grid = (N, HW_pad // tp)

    est_bytes = resident + tp * per_px                      # already includes double buffering
    vmem_limit = int(min(max(est_bytes + 4 * 1024 * 1024, 32 * 1024 * 1024), vmem_budget))

    out3d = pl.pallas_call(
        _fused_deconv_bn_relu_kernel,
        out_shape=jax.ShapeDtypeStruct((N, Nout, HW_pad), compute_dtype),
        grid_spec=pltpu.PrefetchScalarGridSpec(
            num_scalar_prefetch=0,
            grid=grid,
            in_specs=[
                pl.BlockSpec((Nout, Cin), lambda n, p: (0, 0)),         # folded weight
                pl.BlockSpec((Nout, 1), lambda n, p: (0, 0)),           # folded BN bias
                pl.BlockSpec((None, Cin, tp), lambda n, p: (n, 0, p)),  # input pixels
            ],
            out_specs=pl.BlockSpec((None, Nout, tp), lambda n, p: (n, 0, p)),
        ),
        compiler_params=pltpu.CompilerParams(
            dimension_semantics=("parallel", "parallel"),
            vmem_limit_bytes=vmem_limit),
    )(wT, bias_col, x3d)

    # ---- glue: scatter the (Cout, K, K) patches into NCHW (all in compute_dtype) ----
    if HW_pad != HW:
        out3d = out3d[:, :, :HW]        # padded pixel columns hold ReLU(bn_bias); drop them
    out = out3d.reshape(N, Cout, K, K, H, W)
    out = jnp.transpose(out, (0, 1, 4, 2, 5, 3))                        # N,Cout,H,K,W,K
    out = out.reshape(N, Cout, H * K, W * K)
    return out


def _reference_numpy(x, w, gamma, beta, rmean, rvar, K, S, eps=1e-5):
    """Independent numpy reference for ConvTranspose2d + BN(inference) + ReLU."""
    N, Cin, H, W = x.shape
    Cout = w.shape[1]
    Hout, Wout = (H - 1) * S + K, (W - 1) * S + K
    out = np.zeros((N, Cout, Hout, Wout), dtype=np.float64)
    pat = np.einsum('nchw,cokl->nohwkl', x.astype(np.float64), w.astype(np.float64))
    for kh in range(K):
        for kw in range(K):
            out[:, :, kh::S, kw::S] += pat[:, :, :, :, kh, kw]
    scale = gamma / np.sqrt(rvar + eps)
    bias = beta - rmean * scale
    out = out * scale[None, :, None, None] + bias[None, :, None, None]
    return np.maximum(out, 0.0)


def _make_inputs(key, N, Cin, H, W, Cout, K):
    kx, kw, kg, kb, km, kv = jax.random.split(key, 6)
    x = jax.random.normal(kx, (N, Cin, H, W), dtype=jnp.float32)
    # ConvTranspose2d weight, PyTorch layout (in_channels, out_channels, kH, kW), bias=False
    weight = 0.1 * jax.random.normal(kw, (Cin, Cout, K, K), dtype=jnp.float32)
    gamma = 1.0 + 0.1 * jax.random.normal(kg, (Cout,), dtype=jnp.float32)
    beta = 0.1 * jax.random.normal(kb, (Cout,), dtype=jnp.float32)
    running_mean = 0.05 * jax.random.normal(km, (Cout,), dtype=jnp.float32)
    running_var = 1.0 + 0.1 * jax.random.uniform(kv, (Cout,), dtype=jnp.float32)
    return x, weight, gamma, beta, running_mean, running_var


if __name__ == "__main__":
    key = jax.random.PRNGKey(0)
    k1, k2, k3 = jax.random.split(key, 3)

    # Config 1: kernel_size=2, stride=2 (the module's typical upsample usage), HW 128-aligned.
    N, Cin, H, W, Cout, K = 2, 8, 16, 16, 8, 2
    x, weight, gamma, beta, rmean, rvar = _make_inputs(k1, N, Cin, H, W, Cout, K)
    ref = _reference_numpy(np.asarray(x), np.asarray(weight), np.asarray(gamma),
                           np.asarray(beta), np.asarray(rmean), np.asarray(rvar), K, K)

    # f32 compute path: tight tolerance (validates semantics exactly).
    y32 = conv_transpose_bn_act(x, weight, gamma, beta, rmean, rvar,
                                kernel_size=K, stride=K,
                                compute_dtype=jnp.float32)
    y32 = jax.block_until_ready(y32)
    np.testing.assert_allclose(np.asarray(y32), ref, rtol=1e-4, atol=1e-4)

    # bf16 compute path (the optimized default, bf16 output): looser tolerance.
    ybf = conv_transpose_bn_act(x, weight, gamma, beta, rmean, rvar,
                                kernel_size=K, stride=K,
                                compute_dtype=jnp.bfloat16)
    ybf = jax.block_until_ready(ybf)
    np.testing.assert_allclose(np.asarray(ybf).astype(np.float32), ref, rtol=2e-2, atol=2e-2)

    # Config 2: ragged HW=100 (128-lane padding path), K=3, non-8-aligned Nout.
    N2, Cin2, H2, W2, Cout2, K2 = 2, 16, 10, 10, 12, 3
    x2, w2, g2, b2, m2, v2 = _make_inputs(k2, N2, Cin2, H2, W2, Cout2, K2)
    ref2 = _reference_numpy(np.asarray(x2), np.asarray(w2), np.asarray(g2),
                            np.asarray(b2), np.asarray(m2), np.asarray(v2), K2, K2)
    y2 = conv_transpose_bn_act(x2, w2, g2, b2, m2, v2,
                               kernel_size=K2, stride=K2,
                               compute_dtype=jnp.bfloat16)
    y2 = jax.block_until_ready(y2)
    np.testing.assert_allclose(np.asarray(y2).astype(np.float32), ref2, rtol=2e-2, atol=2e-2)

    # Config 3: batch == 1 (exercises the >=2 pixel-tile split for dual-TC occupancy).
    N3, Cin3, H3, W3, Cout3, K3 = 1, 8, 16, 16, 16, 2
    x3, w3, g3, b3, m3, v3 = _make_inputs(k3, N3, Cin3, H3, W3, Cout3, K3)
    ref3 = _reference_numpy(np.asarray(x3), np.asarray(w3), np.asarray(g3),
                            np.asarray(b3), np.asarray(m3), np.asarray(v3), K3, K3)
    y3 = conv_transpose_bn_act(x3, w3, g3, b3, m3, v3,
                               kernel_size=K3, stride=K3,
                               compute_dtype=jnp.bfloat16)
    y3 = jax.block_until_ready(y3)
    np.testing.assert_allclose(np.asarray(y3).astype(np.float32), ref3, rtol=2e-2, atol=2e-2)

    print("KERNEL_OK")
</pallas_src>

<mosaic_0001>
module attributes {stable_mosaic.version = 11 : i64} {
  func.func @_fused_deconv_bn_relu_kernel(%arg0: i32, %arg1: i32, %arg2: memref<32x8xf32, #tpu.memory_space<vmem>>, %arg3: memref<32x1xf32, #tpu.memory_space<vmem>>, %arg4: memref<1x8x256xf32, #tpu.memory_space<vmem>>, %arg5: memref<1x32x256xf32, #tpu.memory_space<vmem>>) attributes {dimension_semantics = [#tpu.dimension_semantics<parallel>, #tpu.dimension_semantics<parallel>], iteration_bounds = array<i64: 2, 1>, scalar_prefetch = 0 : i64, scratch_operands = 0 : i64, tpu.core_type = #tpu.core_type<tc>, window_params = [{pipeline_mode = #tpu.pipeline_mode<synchronous>, transform_indices = @transform_0, window_bounds = array<i64: 32, 8>}, {pipeline_mode = #tpu.pipeline_mode<synchronous>, transform_indices = @transform_1, window_bounds = array<i64: 32, 1>}, {transform_indices = @transform_2, window_bounds = array<i64: 1, 8, 256>}, {transform_indices = @transform_3, window_bounds = array<i64: 1, 32, 256>}]} {
    %c0 = arith.constant 0 : index
    %c0_0 = arith.constant 0 : index
    %0 = vector.load %arg2[%c0, %c0_0] : memref<32x8xf32, #tpu.memory_space<vmem>>, vector<32x8xf32>
    %c0_1 = arith.constant 0 : index
    %c0_2 = arith.constant 0 : index
    %c0_3 = arith.constant 0 : index
    %1 = vector.load %arg4[%c0_1, %c0_2, %c0_3] : memref<1x8x256xf32, #tpu.memory_space<vmem>>, vector<1x8x256xf32>
    %2 = vector.shape_cast %1 : vector<1x8x256xf32> to vector<8x256xf32>
    %cst = arith.constant dense<0.000000e+00> : vector<32x256xf32>
    %3 = tpu.matmul %0, %2, %cst {dimension_numbers = #tpu.dot_dimension_numbers<[1], [0], [0], [1], [0, 0, 1, 1], [], []>} : vector<32x8xf32>, vector<8x256xf32>, vector<32x256xf32> -> vector<32x256xf32>
    %c0_4 = arith.constant 0 : index
    %c0_5 = arith.constant 0 : index
    %4 = vector.load %arg3[%c0_4, %c0_5] : memref<32x1xf32, #tpu.memory_space<vmem>>, vector<32x1xf32>
    %5 = vector.broadcast %4 : vector<32x1xf32> to vector<32x256xf32>
    %6 = arith.addf %3, %5 : vector<32x256xf32>
    %cst_6 = arith.constant 0.000000e+00 : f32
    %7 = vector.broadcast %cst_6 : f32 to vector<32x256xf32>
    %8 = arith.maximumf %6, %7 : vector<32x256xf32>
    %c0_7 = arith.constant 0 : index
    %c0_8 = arith.constant 0 : index
    %c0_9 = arith.constant 0 : index
    %9 = vector.load %arg5[%c0_7, %c0_8, %c0_9] : memref<1x32x256xf32, #tpu.memory_space<vmem>>, vector<1x32x256xf32>
    %10 = vector.shape_cast %9 : vector<1x32x256xf32> to vector<32x256xf32>
    %11 = vector.shape_cast %8 : vector<32x256xf32> to vector<1x32x256xf32>
    tpu.vector_store %arg5[%c0_7, %c0_8, %c0_9], %11 {strides = array<i32>} : memref<1x32x256xf32, #tpu.memory_space<vmem>>, vector<1x32x256xf32>,
    return
  }
  func.func @transform_0(%arg0: i32, %arg1: i32) -> (i32, i32) {
    %c0_i32 = arith.constant 0 : i32
    %c0_i32_0 = arith.constant 0 : i32
    %c0_i32_1 = arith.constant 0 : i32
    return %c0_i32, %c0_i32_0 : i32, i32
  }
  func.func @transform_1(%arg0: i32, %arg1: i32) -> (i32, i32) {
    %c0_i32 = arith.constant 0 : i32
    %c0_i32_0 = arith.constant 0 : i32
    %c0_i32_1 = arith.constant 0 : i32
    return %c0_i32, %c0_i32_0 : i32, i32
  }
  func.func @transform_2(%arg0: i32, %arg1: i32) -> (i32, i32, i32) {
    %c0_i32 = arith.constant 0 : i32
    %c0_i32_0 = arith.constant 0 : i32
    return %arg0, %c0_i32, %arg1 : i32, i32, i32
  }
  func.func @transform_3(%arg0: i32, %arg1: i32) -> (i32, i32, i32) {
    %c0_i32 = arith.constant 0 : i32
    %c0_i32_0 = arith.constant 0 : i32
    return %arg0, %c0_i32, %arg1 : i32, i32, i32
  }
}

</mosaic_0001>

<llo_original>
// kernel: tpu_custom_call.1
$region0: #{tpu_custom_call.1}
  #allocation0 [shape = 'u32[]', space=smem, size = 0x4, offset = 0x4, fixed_abs, tag = 'smem constant byte address 0x4 - core index']
  #allocation1 [shape = 'u32[144,128]{1,0:T(1,128)}', space=vmem, size = 0x12000, scoped, tag = 'internal scratch']
  %s0 = inlined_call_operand.vmem [shape: f32[32,8], index: 0, kind: input, shape index: {}]
  %s1 = inlined_call_operand.vmem [shape: f32[32,1], index: 1, kind: input, shape index: {}]
  %s2 = inlined_call_operand.vmem [shape: f32[2,8,256], index: 2, kind: input, shape index: {}]
  %s3 = inlined_call_operand.hbm [shape: f32[2,32,256], index: 3, kind: output, shape index: {}]
  %s4 = sld [smem:[#allocation0]]
  $region45: #{tpu_custom_call.1} parent=0
    _
  %s6 = ssub.s32 1, %s4
  %s7 = scalar_select 0, %s6, %s4
  $region1: #{tpu_custom_call.1} parent=0
    #allocation2 [shape = 'u8[65536]{0}', space=vmem, size = 0x10000, scoped, tag = 'output window, operand 0']
    #allocation3 [shape = 's32[2]{0}', space=sflag, size = 0x8, scoped, tag = 'scoped memory for tpu_custom_call.1']
    %8 = vsyncpa [#allocation3], 0
    %s9 = scalar_lea.sflag [#allocation3], 1
    %10 = vsyncpa %s9, 0
    loop: start=0, step=1, limit=4
    $region2: #{tpu_custom_call.1} parent=1 // loop_pre_header
      _
    $region3: #{tpu_custom_call.1} parent=1 // loop_header
      %s12 = sphi 0, %s16
      %p13 = scmp.ge.s32.totalorder %s12, 4
      %s19 = sphi 0, %s31
      %s20 = sphi 0, %s27
      %s21 = sphi 0, %s19
      %s22 = sphi 0, %s20
      %s23 = sphi 0, %s21
      %s24 = sphi 0, %s22
      %s32 = sphi 0, %s32
      %s34 = sphi 0, %s32
      %s35 = sphi 0, %s34
      %s49 = sphi 0, %s35
      %s53 = sphi 0, %s53
      %s55 = sphi 0, %s53
      %s56 = sphi 0, %s55
      %s70 = sphi 0, %s56
      %s78 = sphi 0, %s80
      %s81 = sphi 0, %s78
      %s82 = sphi 0, %s81
      %s98 = sphi 0, %s82
      %s106 = sphi 0, %s108
      %s109 = sphi 0, %s106
      %s110 = sphi 0, %s109
      %s126 = sphi 0, %s110
    $region4: #{tpu_custom_call.1} parent=1 // loop_header_branch
      %15 = sbr.rel (%p13) target = $region8
    $region5: #{tpu_custom_call.1} parent=1 // loop_body
      %s17 = ssub.s32 %s12, 1
      %s18 = ssub.s32 %s12, 2
      %s25 = sadd.s32 1, %s20
      %p26 = scmp.ge.s32.totalorder %s25, 1
      %s27 = scalar_select %p26, 0, %s25
      %s28 = sadd.s32 1, %s19
      %s29 = scalar_select %p26, %s28, %s19
      %p30 = scmp.ge.s32.totalorder %s29, 2
      %s31 = scalar_select %p30, 0, %s29
      %s33 = sadd.s32 %s32, 1
      %p36 = scmp.eq.s32.totalorder %s12, 1
      %p37 = scmp.ne.s32.totalorder %s32, %s34
      %p38 = scmp.eq.s32.totalorder %s12, 0
      %p39 = por %p37, %p38
      %p40 = scmp.ne.s32.totalorder %s32, %s34
      %p41 = scmp.eq.s32.totalorder %s17, 1
      %p42 = por %p40, %p41
      %p43 = scmp.ne.s32.totalorder %s34, %s35
      %p44 = scmp.eq.s32.totalorder %s17, 0
      %p45 = por %p43, %p44
      %p46 = scmp.ne.s32.totalorder %s34, %s35
      %p47 = scmp.eq.s32.totalorder %s18, 1
      %p48 = por %p46, %p47
      %p50 = scmp.ne.s32.totalorder %s35, %s49
      %p51 = scmp.eq.s32.totalorder %s18, 0
      %p52 = por %p50, %p51
      %s54 = sadd.s32 %s53, 1
      %p57 = scmp.eq.s32.totalorder %s12, 1
      %p58 = scmp.ne.s32.totalorder %s53, %s55
      %p59 = scmp.eq.s32.totalorder %s12, 0
      %p60 = por %p58, %p59
      %p61 = scmp.ne.s32.totalorder %s53, %s55
      %p62 = scmp.eq.s32.totalorder %s17, 1
      %p63 = por %p61, %p62
      %p64 = scmp.ne.s32.totalorder %s55, %s56
      %p65 = scmp.eq.s32.totalorder %s17, 0
      %p66 = por %p64, %p65
      %p67 = scmp.ne.s32.totalorder %s55, %s56
      %p68 = scmp.eq.s32.totalorder %s18, 1
      %p69 = por %p67, %p68
      %p71 = scmp.ne.s32.totalorder %s56, %s70
      %p72 = scmp.eq.s32.totalorder %s18, 0
      %p73 = por %p71, %p72
      %s74 = ssub.s32 %s19, %s31
      %s75 = ssub.s32 %s20, %s27
      %s76 = sor.u32 %s74, %s75
      %p77 = scmp.eq.s32.totalorder %s76, 0
      %s79 = sadd.s32 %s78, 1
      %s80 = scalar_select %p77, %s78, %s79
      %p83 = pneg %p77
      %p84 = scmp.eq.s32.totalorder %s12, 1
      %p85 = por %p83, %p84
      %p86 = scmp.ne.s32.totalorder %s78, %s81
      %p87 = scmp.eq.s32.totalorder %s12, 0
      %p88 = por %p86, %p87
      %p89 = scmp.ne.s32.totalorder %s78, %s81
      %p90 = scmp.eq.s32.totalorder %s17, 1
      %p91 = por %p89, %p90
      %p92 = scmp.ne.s32.totalorder %s81, %s82
      %p93 = scmp.eq.s32.totalorder %s17, 0
      %p94 = por %p92, %p93
      %p95 = scmp.ne.s32.totalorder %s81, %s82
      %p96 = scmp.eq.s32.totalorder %s18, 1
      %p97 = por %p95, %p96
      %p99 = scmp.ne.s32.totalorder %s82, %s98
      %p100 = scmp.eq.s32.totalorder %s18, 0
      %p101 = por %p99, %p100
      %s102 = ssub.s32 %s19, %s31
      %s103 = ssub.s32 %s20, %s27
      %s104 = sor.u32 %s102, %s103
      %p105 = scmp.eq.s32.totalorder %s104, 0
      %s107 = sadd.s32 %s106, 1
      %s108 = scalar_select %p105, %s106, %s107
      %p111 = pneg %p105
      %p112 = scmp.eq.s32.totalorder %s12, 1
      %p113 = por %p111, %p112
      %p114 = scmp.ne.s32.totalorder %s106, %s109
      %p115 = scmp.eq.s32.totalorder %s12, 0
      %p116 = por %p114, %p115
      %p117 = scmp.ne.s32.totalorder %s106, %s109
      %p118 = scmp.eq.s32.totalorder %s17, 1
      %p119 = por %p117, %p118
      %p120 = scmp.ne.s32.totalorder %s109, %s110
      %p121 = scmp.eq.s32.totalorder %s17, 0
      %p122 = por %p120, %p121
      %p123 = scmp.ne.s32.totalorder %s109, %s110
      %p124 = scmp.eq.s32.totalorder %s18, 1
      %p125 = por %p123, %p124
      %p127 = scmp.ne.s32.totalorder %s110, %s126
      %p128 = scmp.eq.s32.totalorder %s18, 0
      %p129 = por %p127, %p128
      %p130 = scmp.le.s32.totalorder 1, %s12
      %p131 = scmp.lt.s32.totalorder %s12, 3
      %p132 = pnand %p130, %p131
      %p133 = pneg %p132
      // Predicated region
      $region9: #{tpu_custom_call.1} parent=5 // pred_check
        _
      $region10: #{tpu_custom_call.1} parent=5 // pred_check_branch
        %135 = sbr.rel (%p132) target = $region12
      $region11: #{tpu_custom_call.1} parent=5 // pred_region
        %s136 = ssub.s32 %s12, 1
        // Predicated region
        $region13: #{tpu_custom_call.1} parent=11 // pred_check
          %p137 = pneg %p45
        $region14: #{tpu_custom_call.1} parent=11 // pred_check_branch
          %139 = sbr.rel (%p137) target = $region16
        $region15: #{tpu_custom_call.1} parent=11 // pred_region
          _
        $region16: #{tpu_custom_call.1} parent=11 // pred_fallthru
          _
        // Predicated region
        $region17: #{tpu_custom_call.1} parent=11 // pred_check
          %p140 = pneg %p66
        $region18: #{tpu_custom_call.1} parent=11 // pred_check_branch
          %142 = sbr.rel (%p140) target = $region20
        $region19: #{tpu_custom_call.1} parent=11 // pred_region
          _
        $region20: #{tpu_custom_call.1} parent=11 // pred_fallthru
          _
      $region12: #{tpu_custom_call.1} parent=5 // pred_fallthru
        _
      %p143 = scmp.lt.s32.totalorder %s12, 2
      // Predicated region
      $region21: #{tpu_custom_call.1} parent=5 // pred_check
        %p144 = pneg %p143
      $region22: #{tpu_custom_call.1} parent=5 // pred_check_branch
        %146 = sbr.rel (%p144) target = $region24
      $region23: #{tpu_custom_call.1} parent=5 // pred_region
        // Predicated region
        $region25: #{tpu_custom_call.1} parent=23 // pred_check
          %p147 = pneg %p88
        $region26: #{tpu_custom_call.1} parent=23 // pred_check_branch
          %149 = sbr.rel (%p147) target = $region28
        $region27: #{tpu_custom_call.1} parent=23 // pred_region
          %s150 = smul.u32 2, %s20
          %p151 = scmp.lt.s32.totalorder %s19, 1
          %s152 = scalar_select %p151, %s19, 1
          %p153 = scmp.lt.s32.totalorder %s150, 1
          %s154 = scalar_select %p153, %s150, 1
          %s155 = smul.addr %s152, 2
          %s156 = sadd.s32 %s154, %s155
          %s157 = smul.addr %s156, 8
          %s158 = scalar_lea.vmem %s2, %s157
          %s159 = smul.u32 2, %s20
        $region28: #{tpu_custom_call.1} parent=23 // pred_fallthru
          _
      $region24: #{tpu_custom_call.1} parent=5 // pred_fallthru
        _
      %p160 = scmp.le.s32.totalorder 1, %s12
      %p161 = scmp.lt.s32.totalorder %s12, 3
      %p162 = pnand %p160, %p161
      %p163 = pneg %p162
      // Predicated region
      $region29: #{tpu_custom_call.1} parent=5 // pred_check
        _
      $region30: #{tpu_custom_call.1} parent=5 // pred_check_branch
        %165 = sbr.rel (%p162) target = $region32
      $region31: #{tpu_custom_call.1} parent=5 // pred_region
        %s166 = ssub.s32 %s12, 1
        %p167 = pneg %p45
        %p168 = pneg %p42
        %p169 = pneg %p66
        %p170 = pneg %p63
        %s171 = smul.u32 2, %s22
        %p172 = scmp.lt.s32.totalorder %s21, 1
        %s173 = scalar_select %p172, %s21, 1
        %p174 = scmp.lt.s32.totalorder %s171, 1
        %s175 = scalar_select %p174, %s171, 1
        %s176 = smul.addr %s173, 2
        %s177 = sadd.s32 %s175, %s176
        %s178 = smul.addr %s177, 8
        %s179 = scalar_lea.vmem %s2, %s178
        %p180 = pneg %p94
        %p181 = pneg %p91
        %p182 = pneg %p122
        %p183 = pneg %p119
        %s184 = sand.u32 %s109, 1
        %s185 = scalar_lea.sflag [#allocation3], %s184
        %s186 = sand.u32 %s109, 1
        %s187 = smul.addr %s186, 64
        %s188 = scalar_lea.vmem [#allocation2], %s187
        %s189 = smul.u32 2, %s22
        %p190 = scmp.lt.s32.totalorder %s21, 1
        %s191 = scalar_select %p190, %s21, 1
        %p192 = scmp.lt.s32.totalorder %s189, 1
        %s193 = scalar_select %p192, %s189, 1
        %s194 = smul.addr %s191, 2
        %s195 = sadd.s32 %s193, %s194
        %s196 = smul.addr %s195, 8
        %s197 = scalar_lea.vmem %s2, %s196
        %s198 = smul.u32 2, %s22
        %s199 = smul.u32 2, %s22
        %v200 = vld [vmem:[%s0] sm:$0xff]
        %v201 = vld [vmem:[%s0 + $0x8] sm:$0xff]
        %v202 = vld [vmem:[%s0 + $0x10] sm:$0xff]
        %v203 = vld [vmem:[%s0 + $0x18] sm:$0xff]
        %v204 = vld [vmem:[%s197] sm:$0xff]
        %v205 = vld [vmem:[%s197 + $0x8] sm:$0xff]
        %v206 = vld [vmem:[%s1] sm:$0xff]
        %v207 = vld [vmem:[%s1 + $0x8] sm:$0xff]
        %v208 = vld [vmem:[%s1 + $0x10] sm:$0xff]
        %v209 = vld [vmem:[%s1 + $0x18] sm:$0xff]
        %211 = vset.pattern.permute.xlu0 0
        %212 = vperm.xlu0 %211, %v206
        %v213 = vpop.permute.xlu0 %212
        %216 = vset.pattern.permute.xlu0 0
        %217 = vperm.xlu0 %216, %v207
        %v218 = vpop.permute.xlu0 %217
        %221 = vset.pattern.permute.xlu0 0
        %222 = vperm.xlu0 %221, %v208
        %v223 = vpop.permute.xlu0 %222
        %226 = vset.pattern.permute.xlu0 0
        %227 = vperm.xlu0 %226, %v209
        %v228 = vpop.permute.xlu0 %227
        %vm230 = vcmask 64512
        %v232 = vsel %vm230, %v200, 0
        %v235 = vsel %vm230, %v201, 0
        %v238 = vsel %vm230, %v202, 0
        %v241 = vsel %vm230, %v203, 0
        %243 = vmatprep.subr.mxu0 %v205
        %244 = vmatpush1.msra.mxu0 %v204
        %245 = vmatprep.subr.mxu0 0.0
        %246 = vmatpush1.msra.mxu0 0.0
        %247 = vmatprep.subr.mxu0 0.0
        %248 = vmatpush1.msra.mxu0 0.0
        %249 = vmatprep.subr.mxu0 0.0
        %250 = vmatpush1.msra.mxu0 0.0
        %251 = vmatprep.subr.mxu0 0.0
        %252 = vmatpush1.msra.mxu0 0.0
        %253 = vmatprep.subr.mxu0 0.0
        %254 = vmatpush1.msra.mxu0 0.0
        %255 = vmatprep.subr.mxu0 0.0
        %256 = vmatpush1.msra.mxu0 0.0
        %257 = vmatprep.subr.mxu0 0.0
        %258 = vmatpush1.msra.mxu0 0.0
        %259 = vmatprep.subr.mxu0 0.0
        %260 = vmatpush1.msra.mxu0 0.0
        %261 = vmatprep.subr.mxu0 0.0
        %262 = vmatpush1.msra.mxu0 0.0
        %263 = vmatprep.subr.mxu0 0.0
        %264 = vmatpush1.msra.mxu0 0.0
        %265 = vmatprep.subr.mxu0 0.0
        %266 = vmatpush1.msra.mxu0 0.0
        %267 = vmatprep.subr.mxu0 0.0
        %268 = vmatpush1.msra.mxu0 0.0
        %269 = vmatprep.subr.mxu0 0.0
        %270 = vmatpush1.msra.mxu0 0.0
        %271 = vmatprep.subr.mxu0 0.0
        %272 = vmatpush1.msra.mxu0 0.0
        %273 = vmatprep.subr.mxu0 0.0
        %274 = vmatpush1.msra.mxu0 0.0
        %275 = vmatprep.subr.mxu0 0.0
        %276 = vmatpush1.msra.mxu0 0.0
        %277 = vmatprep.subr.mxu0 0.0
        %278 = vmatpush1.msra.mxu0 0.0
        %279 = vmatprep.subr.mxu0 0.0
        %280 = vmatpush1.msra.mxu0 0.0
        %281 = vmatprep.subr.mxu0 0.0
        %282 = vmatpush1.msra.mxu0 0.0
        %283 = vmatprep.subr.mxu0 0.0
        %284 = vmatpush1.msra.mxu0 0.0
        %285 = vmatprep.subr.mxu0 0.0
        %286 = vmatpush1.msra.mxu0 0.0
        %287 = vmatprep.subr.mxu0 0.0
        %288 = vmatpush1.msra.mxu0 0.0
        %289 = vmatprep.subr.mxu0 0.0
        %290 = vmatpush1.msra.mxu0 0.0
        %291 = vmatprep.subr.mxu0 0.0
        %292 = vmatpush1.msra.mxu0 0.0
        %293 = vmatprep.subr.mxu0 0.0
        %294 = vmatpush1.msra.mxu0 0.0
        %295 = vmatprep.subr.mxu0 0.0
        %296 = vmatpush1.msra.mxu0 0.0
        %297 = vmatprep.subr.mxu0 0.0
        %298 = vmatpush1.msra.mxu0 0.0
        %299 = vmatprep.subr.mxu0 0.0
        %300 = vmatpush1.msra.mxu0 0.0
        %301 = vmatprep.subr.mxu0 0.0
        %302 = vmatpush1.msra.mxu0 0.0
        %303 = vmatprep.subr.mxu0 0.0
        %304 = vmatpush1.msra.mxu0 0.0
        %305 = vmatprep.subr.mxu0 0.0
        %306 = vmatpush1.msra.mxu0 0.0
        %307 = vmatprep.mubr.f32.mxu0 0.0
        %308 = vmatmul.mubr.f32.gmra.mrb[0].mxu0 %v232
        %v309 = vpop.f32.mrb[0].mxu0
        %v310 = vadd.f32 %v213, %v309
        %v311 = vpop.f32.mrb[0].mxu0
        %v312 = vadd.f32 %v213, %v311
        %313 = vmatprep.mubr.f32.mxu0 0.0
        %314 = vmatmul.mubr.f32.gmra.mrb[0].mxu0 %v235
        %v315 = vpop.f32.mrb[0].mxu0
        %v316 = vadd.f32 %v218, %v315
        %v317 = vpop.f32.mrb[0].mxu0
        %v318 = vadd.f32 %v218, %v317
        %319 = vmatprep.mubr.f32.mxu0 0.0
        %320 = vmatmul.mubr.f32.gmra.mrb[0].mxu0 %v238
        %v321 = vpop.f32.mrb[0].mxu0
        %v322 = vadd.f32 %v223, %v321
        %v323 = vpop.f32.mrb[0].mxu0
        %v324 = vadd.f32 %v223, %v323
        %325 = vmatprep.mubr.f32.mxu0 0.0
        %326 = vmatmul.mubr.f32.gmra.mrb[0].mxu0 %v241
        %v327 = vpop.f32.mrb[0].mxu0
        %v328 = vadd.f32 %v228, %v327
        %v329 = vpop.f32.mrb[0].mxu0
        %v330 = vadd.f32 %v228, %v329
        %331 = vdwg.mxu0
        %v332 = vmax.f32 %v310, 0.0
        %v333 = vmax.f32 %v312, 0.0
        %v334 = vmax.f32 %v316, 0.0
        %v335 = vmax.f32 %v318, 0.0
        %v336 = vmax.f32 %v322, 0.0
        %v337 = vmax.f32 %v324, 0.0
        %v338 = vmax.f32 %v328, 0.0
        %v339 = vmax.f32 %v330, 0.0
        %340 = vst [vmem:[%s188] sm:$0xff] %v332
        %341 = vst [vmem:[%s188 + $0x8] sm:$0xff] %v333
        %342 = vst [vmem:[%s188 + $0x10] sm:$0xff] %v334
        %343 = vst [vmem:[%s188 + $0x18] sm:$0xff] %v335
        %344 = vst [vmem:[%s188 + $0x20] sm:$0xff] %v336
        %345 = vst [vmem:[%s188 + $0x28] sm:$0xff] %v337
        %346 = vst [vmem:[%s188 + $0x30] sm:$0xff] %v338
        %347 = vst [vmem:[%s188 + $0x38] sm:$0xff] %v339
        %s348 = sand.u32 %s109, 1
        %s349 = scalar_lea.sflag [#allocation3], %s348
        %s350 = sand.u32 %s109, 1
        %s351 = smul.addr %s350, 64
        %s352 = scalar_lea.vmem [#allocation2], %s351
        // Predicated region
        $region33: #{tpu_custom_call.1} parent=31 // pred_check
          %p353 = pneg %p119
        $region34: #{tpu_custom_call.1} parent=31 // pred_check_branch
          %355 = sbr.rel (%p353) target = $region36
        $region35: #{tpu_custom_call.1} parent=31 // pred_region
          %s356 = smul.u32 2, %s22
          %s358 = ssub.s32 1024, 1024
          %359 = vsyncadd %s349, %s358
          %s360 = smul.addr %s21, 8
          %s361 = sadd.s32 %s356, %s360
          %s362 = smul.addr %s361, 128
          %s363 = scalar_lea.hbm %s3, %s362
          %s364 = sshll.u32 %s352, 4
          %s365 = int_to_ptr.vmem [resolvable:$true] %s364
          %370 = dma.vmem_to_hbm [thread:$0]  %s365, 1024, %s363, %s349, 256, 256, 16
        $region36: #{tpu_custom_call.1} parent=31 // pred_fallthru
          _
      $region32: #{tpu_custom_call.1} parent=5 // pred_fallthru
        _
      %p371 = scmp.le.s32.totalorder 2, %s12
      // Predicated region
      $region37: #{tpu_custom_call.1} parent=5 // pred_check
        %p372 = pneg %p371
      $region38: #{tpu_custom_call.1} parent=5 // pred_check_branch
        %374 = sbr.rel (%p372) target = $region40
      $region39: #{tpu_custom_call.1} parent=5 // pred_region
        %s375 = ssub.s32 %s12, 2
        // Predicated region
        $region41: #{tpu_custom_call.1} parent=39 // pred_check
          %p376 = pneg %p125
        $region42: #{tpu_custom_call.1} parent=39 // pred_check_branch
          %378 = sbr.rel (%p376) target = $region44
        $region43: #{tpu_custom_call.1} parent=39 // pred_region
          %s379 = sand.u32 %s110, 1
          %s380 = scalar_lea.sflag [#allocation3], %s379
          %s381 = sand.u32 %s110, 1
          %s382 = smul.addr %s381, 64
          %s383 = scalar_lea.vmem [#allocation2], %s382
          %384 = dma.done %s380, 1024
        $region44: #{tpu_custom_call.1} parent=39 // pred_fallthru
          _
      $region40: #{tpu_custom_call.1} parent=5 // pred_fallthru
        _
    $region6: #{tpu_custom_call.1} parent=1 // loop_footer
      %s16 = sadd.s32 1, %s12
    $region7: #{tpu_custom_call.1} parent=1 // loop_footer_branch
      %11 = sbr.rel target = $region3
    $region8: #{tpu_custom_call.1} parent=1 // loop_exit
      _
    %385 = vsyncpa [#allocation3], 1
    %s386 = scalar_lea.sflag [#allocation3], 1
    %387 = vsyncpa %s386, 1

</llo_original>
